<compile_context>
chip_gen: v7x
topology: tpu7x:2x2x1
jax: 0.10.0
libtpu: 0.0.40
codegen_flags: <defaults>
</compile_context>

<pallas_src>
import functools

import jax
import jax.numpy as jnp
from jax import lax
from jax.experimental import pallas as pl
from jax.experimental.pallas import tpu as pltpu


def _round_up(x, m):
    return (x + m - 1) // m * m


def _ntxent_kernel(q_ref, k_ref, out_ref, m_sc, l_sc, d_sc, *,
                   inv_temp, n_valid, n_pad, block_rows, mm_dtype):
    i = pl.program_id(1)          # query row block
    k = pl.program_id(2)          # key block (reduction axis, innermost)
    pad = n_pad > n_valid         # static: any padded rows/cols at all?

    @pl.when(k == 0)
    def _init():
        m_sc[...] = jnp.full_like(m_sc, -jnp.inf)
        l_sc[...] = jnp.zeros_like(l_sc)
        d_sc[...] = jnp.zeros_like(d_sc)

    q = q_ref[...].astype(jnp.float32)
    kb = k_ref[...].astype(jnp.float32)

    # F.normalize: x / max(||x||, 1e-12) == x * rsqrt(max(||x||^2, 1e-24)).
    eps_sq = jnp.float32(1e-24)
    q_inv = lax.rsqrt(jnp.maximum(jnp.sum(q * q, axis=-1, keepdims=True), eps_sq))
    k_inv = lax.rsqrt(jnp.maximum(jnp.sum(kb * kb, axis=-1, keepdims=True), eps_sq))
    qn = q * (q_inv * jnp.float32(inv_temp))   # fold 1/temperature into queries
    kn = kb * k_inv

    # Positive-pair (diagonal) logits: this query block pairs with the key
    # rows at the same global row indices, i.e. key block k == i.
    @pl.when(k == i)
    def _diag():
        d_sc[...] = jnp.sum(qn * kn, axis=-1, keepdims=True)

    # (tm, D) x (tn, D) contracted on D -> (tm, tn) similarity tile on the MXU.
    s = lax.dot_general(qn.astype(mm_dtype), kn.astype(mm_dtype),
                        dimension_numbers=(((1,), (1,)), ((), ())),
                        preferred_element_type=jnp.float32)

    # Mask padded key columns out of the logsumexp (only if padding exists).
    if pad:
        col = k * block_rows + lax.broadcasted_iota(jnp.int32, s.shape, 1)
        s = jnp.where(col < n_valid, s, jnp.float32(-1e30))

    # Online logsumexp across key blocks.
    m_new = jnp.maximum(m_sc[...], jnp.max(s, axis=-1, keepdims=True))
    l_sc[...] = (l_sc[...] * jnp.exp(m_sc[...] - m_new)
                 + jnp.sum(jnp.exp(s - m_new), axis=-1, keepdims=True))
    m_sc[...] = m_new

    @pl.when(k == pl.num_programs(2) - 1)
    def _finalize():
        lse = m_sc[...] + jnp.log(l_sc[...])
        per_row = lse - d_sc[...]                       # (bm, 1)
        if pad:
            row = i * block_rows + lax.broadcasted_iota(jnp.int32,
                                                        per_row.shape, 0)
            per_row = jnp.where(row < n_valid, per_row, jnp.float32(0.0))
        out_ref[...] = jnp.sum(per_row, axis=0, keepdims=True)   # (1, 1)


def ntxent_loss(z_i, z_j, temperature=1.0, block_rows=256):
    """NT-Xent loss of two (N, D) embedding batches. Returns a f32 scalar."""
    assert z_i.shape == z_j.shape and z_i.ndim == 2
    n, d = z_i.shape

    d_pad = _round_up(d, 128)                               # lane-dense features
    bm = min(_round_up(block_rows, 8), _round_up(n, 8))     # sublane-mult blocks
    n_pad = _round_up(n, bm)
    num_blk = n_pad // bm

    # Stack the two views; pass p uses stacked[p] as queries, stacked[1-p] keys.
    zs = jnp.stack([z_i, z_j], axis=0)
    zs = jnp.pad(zs, ((0, 0), (0, n_pad - n), (0, d_pad - d)))

    mm_dtype = jnp.bfloat16 if zs.dtype == jnp.bfloat16 else jnp.float32
    kernel = functools.partial(
        _ntxent_kernel, inv_temp=1.0 / float(temperature), n_valid=n,
        n_pad=n_pad, block_rows=bm, mm_dtype=mm_dtype)

    partials = pl.pallas_call(
        kernel,
        out_shape=jax.ShapeDtypeStruct((2, num_blk, 1, 1), jnp.float32),
        grid_spec=pltpu.PrefetchScalarGridSpec(
            num_scalar_prefetch=0,
            grid=(2, num_blk, num_blk),
            in_specs=[
                pl.BlockSpec((None, bm, d_pad), lambda p, i, k: (p, i, 0)),
                pl.BlockSpec((None, bm, d_pad), lambda p, i, k: (1 - p, k, 0)),
            ],
            out_specs=pl.BlockSpec((None, None, 1, 1),
                                   lambda p, i, k: (p, i, 0, 0)),
            scratch_shapes=[
                pltpu.VMEM((bm, 1), jnp.float32),   # running max
                pltpu.VMEM((bm, 1), jnp.float32),   # running sum-exp
                pltpu.VMEM((bm, 1), jnp.float32),   # diagonal (positive) logit
            ],
        ),
        compiler_params=pltpu.CompilerParams(
            dimension_semantics=("parallel", "parallel", "arbitrary")),
    )(zs, zs)

    return jnp.sum(partials) * (0.5 / n)


def _ntxent_ref(z_i, z_j, temperature):
    zi_n = z_i / jnp.maximum(jnp.linalg.norm(z_i, axis=-1, keepdims=True), 1e-12)
    zj_n = z_j / jnp.maximum(jnp.linalg.norm(z_j, axis=-1, keepdims=True), 1e-12)
    sim = (zi_n @ zj_n.T) / temperature
    n = z_i.shape[0]
    logits = jnp.concatenate([sim, sim.T], axis=0)
    labels = jnp.concatenate([jnp.arange(n), jnp.arange(n)])
    lse = jax.scipy.special.logsumexp(logits, axis=-1)
    return jnp.mean(lse - logits[jnp.arange(2 * n), labels])


if __name__ == "__main__":
    key = jax.random.PRNGKey(0)
    k1, k2, k3, k4 = jax.random.split(key, 4)

    # Small shape consistent with the module: batch of 8 embedding pairs, D=32.
    N, D = 8, 32
    z_i = jax.random.normal(k1, (N, D), dtype=jnp.float32)
    z_j = jax.random.normal(k2, (N, D), dtype=jnp.float32)
    loss = ntxent_loss(z_i, z_j, temperature=0.5)
    jax.block_until_ready(loss)
    ref = _ntxent_ref(z_i, z_j, 0.5)
    assert jnp.allclose(loss, ref, atol=1e-5, rtol=1e-5), (loss, ref)

    # Exercise multi-block tiling + row/column padding (N, D not tile-aligned).
    N2, D2 = 20, 40
    a = jax.random.normal(k3, (N2, D2), dtype=jnp.float32)
    b = jax.random.normal(k4, (N2, D2), dtype=jnp.float32)
    loss2 = ntxent_loss(a, b, temperature=1.0, block_rows=8)
    jax.block_until_ready(loss2)
    ref2 = _ntxent_ref(a, b, 1.0)
    assert jnp.allclose(loss2, ref2, atol=1e-5, rtol=1e-5), (loss2, ref2)

    print("KERNEL_OK")
</pallas_src>

<mosaic_0001>
module attributes {stable_mosaic.version = 11 : i64} {
  func.func @_ntxent_kernel(%arg0: i32, %arg1: i32, %arg2: i32, %arg3: memref<1x8x128xf32, #tpu.memory_space<vmem>>, %arg4: memref<1x8x128xf32, #tpu.memory_space<vmem>>, %arg5: memref<1x1x1x1xf32, #tpu.memory_space<vmem>>, %arg6: memref<8x1xf32, #tpu.memory_space<vmem>>, %arg7: memref<8x1xf32, #tpu.memory_space<vmem>>, %arg8: memref<8x1xf32, #tpu.memory_space<vmem>>) attributes {dimension_semantics = [#tpu.dimension_semantics<parallel>, #tpu.dimension_semantics<parallel>, #tpu.dimension_semantics<arbitrary>], iteration_bounds = array<i64: 2, 1, 1>, scalar_prefetch = 0 : i64, scratch_operands = 3 : i64, tpu.core_type = #tpu.core_type<tc>, window_params = [{transform_indices = @transform_0, window_bounds = array<i64: 1, 8, 128>}, {transform_indices = @transform_1, window_bounds = array<i64: 1, 8, 128>}, {transform_indices = @transform_2, window_bounds = array<i64: 1, 1, 1, 1>}]} {
    %c0_i32 = arith.constant 0 : i32
    %0 = arith.cmpi eq, %arg2, %c0_i32 : i32
    %1 = arith.extui %0 : i1 to i32
    %c0_i32_0 = arith.constant 0 : i32
    %2 = arith.cmpi ne, %1, %c0_i32_0 : i32
    scf.if %2 {
      %cst_26 = arith.constant 0xFF800000 : f32
      %49 = vector.broadcast %cst_26 : f32 to vector<8x1xf32>
      %c0_27 = arith.constant 0 : index
      %c0_28 = arith.constant 0 : index
      %50 = vector.load %arg6[%c0_27, %c0_28] : memref<8x1xf32, #tpu.memory_space<vmem>>, vector<8x1xf32>
      tpu.vector_store %arg6[%c0_27, %c0_28], %49 {strides = array<i32>} : memref<8x1xf32, #tpu.memory_space<vmem>>, vector<8x1xf32>,
      %cst_29 = arith.constant 0.000000e+00 : f32
      %51 = vector.broadcast %cst_29 : f32 to vector<8x1xf32>
      %c0_30 = arith.constant 0 : index
      %c0_31 = arith.constant 0 : index
      %52 = vector.load %arg7[%c0_30, %c0_31] : memref<8x1xf32, #tpu.memory_space<vmem>>, vector<8x1xf32>
      tpu.vector_store %arg7[%c0_30, %c0_31], %51 {strides = array<i32>} : memref<8x1xf32, #tpu.memory_space<vmem>>, vector<8x1xf32>,
      %cst_32 = arith.constant 0.000000e+00 : f32
      %53 = vector.broadcast %cst_32 : f32 to vector<8x1xf32>
      %c0_33 = arith.constant 0 : index
      %c0_34 = arith.constant 0 : index
      %54 = vector.load %arg8[%c0_33, %c0_34] : memref<8x1xf32, #tpu.memory_space<vmem>>, vector<8x1xf32>
      tpu.vector_store %arg8[%c0_33, %c0_34], %53 {strides = array<i32>} : memref<8x1xf32, #tpu.memory_space<vmem>>, vector<8x1xf32>,
    } else {
    }
    %c0 = arith.constant 0 : index
    %c0_1 = arith.constant 0 : index
    %c0_2 = arith.constant 0 : index
    %3 = vector.load %arg3[%c0, %c0_1, %c0_2] : memref<1x8x128xf32, #tpu.memory_space<vmem>>, vector<1x8x128xf32>
    %4 = vector.shape_cast %3 : vector<1x8x128xf32> to vector<8x128xf32>
    %c0_3 = arith.constant 0 : index
    %c0_4 = arith.constant 0 : index
    %c0_5 = arith.constant 0 : index
    %5 = vector.load %arg4[%c0_3, %c0_4, %c0_5] : memref<1x8x128xf32, #tpu.memory_space<vmem>>, vector<1x8x128xf32>
    %6 = vector.shape_cast %5 : vector<1x8x128xf32> to vector<8x128xf32>
    %7 = arith.mulf %4, %4 : vector<8x128xf32>
    %cst = arith.constant dense<0.000000e+00> : vector<8xf32>
    %8 = vector.multi_reduction <add>, %7, %cst [1] : vector<8x128xf32> to vector<8xf32>
    %9 = vector.shape_cast %8 : vector<8xf32> to vector<8x1xf32>
    %cst_6 = arith.constant 1.000000e-24 : f32
    %10 = vector.broadcast %cst_6 : f32 to vector<8x1xf32>
    %11 = arith.maximumf %9, %10 : vector<8x1xf32>
    %12 = math.rsqrt %11 : vector<8x1xf32>
    %13 = arith.mulf %6, %6 : vector<8x128xf32>
    %cst_7 = arith.constant dense<0.000000e+00> : vector<8xf32>
    %14 = vector.multi_reduction <add>, %13, %cst_7 [1] : vector<8x128xf32> to vector<8xf32>
    %15 = vector.shape_cast %14 : vector<8xf32> to vector<8x1xf32>
    %cst_8 = arith.constant 1.000000e-24 : f32
    %16 = vector.broadcast %cst_8 : f32 to vector<8x1xf32>
    %17 = arith.maximumf %15, %16 : vector<8x1xf32>
    %18 = math.rsqrt %17 : vector<8x1xf32>
    %cst_9 = arith.constant 2.000000e+00 : f32
    %19 = vector.broadcast %cst_9 : f32 to vector<8x1xf32>
    %20 = arith.mulf %12, %19 : vector<8x1xf32>
    %21 = vector.broadcast %20 : vector<8x1xf32> to vector<8x128xf32>
    %22 = arith.mulf %4, %21 : vector<8x128xf32>
    %23 = vector.broadcast %18 : vector<8x1xf32> to vector<8x128xf32>
    %24 = arith.mulf %6, %23 : vector<8x128xf32>
    %25 = arith.cmpi eq, %arg2, %arg1 : i32
    %26 = arith.extui %25 : i1 to i32
    %c0_i32_10 = arith.constant 0 : i32
    %27 = arith.cmpi ne, %26, %c0_i32_10 : i32
    scf.if %27 {
      %49 = arith.mulf %22, %24 : vector<8x128xf32>
      %cst_26 = arith.constant dense<0.000000e+00> : vector<8xf32>
      %50 = vector.multi_reduction <add>, %49, %cst_26 [1] : vector<8x128xf32> to vector<8xf32>
      %51 = vector.shape_cast %50 : vector<8xf32> to vector<8x1xf32>
      %c0_27 = arith.constant 0 : index
      %c0_28 = arith.constant 0 : index
      %52 = vector.load %arg8[%c0_27, %c0_28] : memref<8x1xf32, #tpu.memory_space<vmem>>, vector<8x1xf32>
      tpu.vector_store %arg8[%c0_27, %c0_28], %51 {strides = array<i32>} : memref<8x1xf32, #tpu.memory_space<vmem>>, vector<8x1xf32>,
    } else {
    }
    %cst_11 = arith.constant dense<0.000000e+00> : vector<8x8xf32>
    %28 = tpu.matmul %22, %24, %cst_11 {dimension_numbers = #tpu.dot_dimension_numbers<[1], [1], [0], [0], [0, 0, 1, 0], [], []>} : vector<8x128xf32>, vector<8x128xf32>, vector<8x8xf32> -> vector<8x8xf32>
    %c0_12 = arith.constant 0 : index
    %c0_13 = arith.constant 0 : index
    %29 = vector.load %arg6[%c0_12, %c0_13] : memref<8x1xf32, #tpu.memory_space<vmem>>, vector<8x1xf32>
    %cst_14 = arith.constant dense<0xFF800000> : vector<8xf32>
    %30 = vector.multi_reduction <maximumf>, %28, %cst_14 [1] : vector<8x8xf32> to vector<8xf32>
    %31 = vector.shape_cast %30 : vector<8xf32> to vector<8x1xf32>
    %32 = arith.maximumf %29, %31 : vector<8x1xf32>
    %c0_15 = arith.constant 0 : index
    %c0_16 = arith.constant 0 : index
    %33 = vector.load %arg7[%c0_15, %c0_16] : memref<8x1xf32, #tpu.memory_space<vmem>>, vector<8x1xf32>
    %c0_17 = arith.constant 0 : index
    %c0_18 = arith.constant 0 : index
    %34 = vector.load %arg6[%c0_17, %c0_18] : memref<8x1xf32, #tpu.memory_space<vmem>>, vector<8x1xf32>
    %35 = arith.subf %34, %32 : vector<8x1xf32>
    %36 = math.exp %35 : vector<8x1xf32>
    %37 = arith.mulf %33, %36 : vector<8x1xf32>
    %38 = vector.broadcast %32 : vector<8x1xf32> to vector<8x8xf32>
    %39 = arith.subf %28, %38 : vector<8x8xf32>
    %40 = math.exp %39 : vector<8x8xf32>
    %cst_19 = arith.constant dense<0.000000e+00> : vector<8xf32>
    %41 = vector.multi_reduction <add>, %40, %cst_19 [1] : vector<8x8xf32> to vector<8xf32>
    %42 = vector.shape_cast %41 : vector<8xf32> to vector<8x1xf32>
    %43 = arith.addf %37, %42 : vector<8x1xf32>
    %c0_20 = arith.constant 0 : index
    %c0_21 = arith.constant 0 : index
    %44 = vector.load %arg7[%c0_20, %c0_21] : memref<8x1xf32, #tpu.memory_space<vmem>>, vector<8x1xf32>
    tpu.vector_store %arg7[%c0_20, %c0_21], %43 {strides = array<i32>} : memref<8x1xf32, #tpu.memory_space<vmem>>, vector<8x1xf32>,
    %c0_22 = arith.constant 0 : index
    %c0_23 = arith.constant 0 : index
    %45 = vector.load %arg6[%c0_22, %c0_23] : memref<8x1xf32, #tpu.memory_space<vmem>>, vector<8x1xf32>
    tpu.vector_store %arg6[%c0_22, %c0_23], %32 {strides = array<i32>} : memref<8x1xf32, #tpu.memory_space<vmem>>, vector<8x1xf32>,
    %c0_i32_24 = arith.constant 0 : i32
    %46 = arith.cmpi eq, %arg2, %c0_i32_24 : i32
    %47 = arith.extui %46 : i1 to i32
    %c0_i32_25 = arith.constant 0 : i32
    %48 = arith.cmpi ne, %47, %c0_i32_25 : i32
    scf.if %48 {
      %c0_26 = arith.constant 0 : index
      %c0_27 = arith.constant 0 : index
      %49 = vector.load %arg6[%c0_26, %c0_27] : memref<8x1xf32, #tpu.memory_space<vmem>>, vector<8x1xf32>
      %c0_28 = arith.constant 0 : index
      %c0_29 = arith.constant 0 : index
      %50 = vector.load %arg7[%c0_28, %c0_29] : memref<8x1xf32, #tpu.memory_space<vmem>>, vector<8x1xf32>
      %51 = math.log %50 : vector<8x1xf32>
      %52 = arith.addf %49, %51 : vector<8x1xf32>
      %c0_30 = arith.constant 0 : index
      %c0_31 = arith.constant 0 : index
      %53 = vector.load %arg8[%c0_30, %c0_31] : memref<8x1xf32, #tpu.memory_space<vmem>>, vector<8x1xf32>
      %54 = arith.subf %52, %53 : vector<8x1xf32>
      %cst_32 = arith.constant dense<0.000000e+00> : vector<1xf32>
      %55 = vector.multi_reduction <add>, %54, %cst_32 [0] : vector<8x1xf32> to vector<1xf32>
      %56 = vector.shape_cast %55 : vector<1xf32> to vector<1x1xf32>
      %c0_33 = arith.constant 0 : index
      %c0_34 = arith.constant 0 : index
      %c0_35 = arith.constant 0 : index
      %c0_36 = arith.constant 0 : index
      %57 = vector.load %arg5[%c0_33, %c0_34, %c0_35, %c0_36] : memref<1x1x1x1xf32, #tpu.memory_space<vmem>>, vector<1x1x1x1xf32>
      %58 = vector.shape_cast %57 : vector<1x1x1x1xf32> to vector<1x1xf32>
      %59 = vector.shape_cast %56 : vector<1x1xf32> to vector<1x1x1x1xf32>
      tpu.vector_store %arg5[%c0_33, %c0_34, %c0_35, %c0_36], %59 {strides = array<i32>} : memref<1x1x1x1xf32, #tpu.memory_space<vmem>>, vector<1x1x1x1xf32>,
    } else {
    }
    return
  }
  func.func @transform_0(%arg0: i32, %arg1: i32, %arg2: i32) -> (i32, i32, i32) {
    %c0_i32 = arith.constant 0 : i32
    %c0_i32_0 = arith.constant 0 : i32
    return %arg0, %arg1, %c0_i32 : i32, i32, i32
  }
  func.func @transform_1(%arg0: i32, %arg1: i32, %arg2: i32) -> (i32, i32, i32) {
    %c1_i32 = arith.constant 1 : i32
    %0 = arith.subi %c1_i32, %arg0 : i32
    %c0_i32 = arith.constant 0 : i32
    %c0_i32_0 = arith.constant 0 : i32
    return %0, %arg2, %c0_i32 : i32, i32, i32
  }
  func.func @transform_2(%arg0: i32, %arg1: i32, %arg2: i32) -> (i32, i32, i32, i32) {
    %c0_i32 = arith.constant 0 : i32
    %c0_i32_0 = arith.constant 0 : i32
    %c0_i32_1 = arith.constant 0 : i32
    return %arg0, %arg1, %c0_i32, %c0_i32_0 : i32, i32, i32, i32
  }
}

</mosaic_0001>

<llo_original>
// kernel: tpu_custom_call.1
$region0: #{tpu_custom_call.1}
  #allocation0 [shape = 'u32[]', space=smem, size = 0x4, offset = 0x4, fixed_abs, tag = 'smem constant byte address 0x4 - core index']
  #allocation1 [shape = 'u32[144,128]{1,0:T(1,128)}', space=vmem, size = 0x12000, scoped, tag = 'internal scratch']
  #allocation2 [shape = 'f32[8,1]{1,0:T(8,128)}', space=vmem, size = 0x1000, scoped, tag = 'scratch operand']
  #allocation3 [shape = 'f32[8,1]{1,0:T(8,128)}', space=vmem, size = 0x1000, scoped, tag = 'scratch operand']
  #allocation4 [shape = 'f32[8,1]{1,0:T(8,128)}', space=vmem, size = 0x1000, scoped, tag = 'scratch operand']
  %s0 = inlined_call_operand.hbm [shape: f32[2,8,128], index: 0, kind: input, shape index: {}]
  %s1 = inlined_call_operand.hbm [shape: f32[2,8,128], index: 1, kind: input, shape index: {}]
  %s2 = inlined_call_operand.vmem [shape: f32[2,1,1,1], index: 2, kind: output, shape index: {}]
  %s3 = sld [smem:[#allocation0]]
  $region61: #{tpu_custom_call.1} parent=0
    _
  %s5 = ssub.s32 1, %s3
  %s6 = scalar_select 0, %s5, %s3
  $region1: #{tpu_custom_call.1} parent=0
    #allocation5 [shape = 'u8[8192]{0}', space=vmem, size = 0x2000, scoped, tag = 'input window, operand 0']
    #allocation6 [shape = 's32[2]{0}', space=sflag, size = 0x8, scoped, tag = 'scoped memory for tpu_custom_call.1']
    #allocation7 [shape = 'u8[8192]{0}', space=vmem, size = 0x2000, scoped, tag = 'input window, operand 1']
    #allocation8 [shape = 's32[2]{0}', space=sflag, size = 0x8, scoped, tag = 'scoped memory for tpu_custom_call.1']
    %7 = vsyncpa [#allocation6], 0
    %s8 = scalar_lea.sflag [#allocation6], 1
    %9 = vsyncpa %s8, 0
    %10 = vsyncpa [#allocation8], 0
    %s11 = scalar_lea.sflag [#allocation8], 1
    %12 = vsyncpa %s11, 0
    loop: start=0, step=1, limit=4
    $region2: #{tpu_custom_call.1} parent=1 // loop_pre_header
      _
    $region3: #{tpu_custom_call.1} parent=1 // loop_header
      %s14 = sphi 0, %s18
      %p15 = scmp.ge.s32.totalorder %s14, 4
      %s21 = sphi 0, %s40
      %s22 = sphi 0, %s36
      %s23 = sphi 0, %s32
      %s24 = sphi 0, %s21
      %s25 = sphi 0, %s22
      %s26 = sphi 0, %s23
      %s27 = sphi 0, %s24
      %s28 = sphi 0, %s25
      %s29 = sphi 0, %s26
      %s45 = sphi 0, %s47
      %s48 = sphi 0, %s45
      %s49 = sphi 0, %s48
      %s65 = sphi 0, %s49
      %s75 = sphi 0, %s77
      %s78 = sphi 0, %s75
      %s79 = sphi 0, %s78
      %s95 = sphi 0, %s79
      %s103 = sphi 0, %s105
      %s106 = sphi 0, %s103
      %s107 = sphi 0, %s106
      %s123 = sphi 0, %s107
    $region4: #{tpu_custom_call.1} parent=1 // loop_header_branch
      %17 = sbr.rel (%p15) target = $region8
    $region5: #{tpu_custom_call.1} parent=1 // loop_body
      %s19 = ssub.s32 %s14, 1
      %s20 = ssub.s32 %s14, 2
      %s30 = sadd.s32 1, %s23
      %p31 = scmp.ge.s32.totalorder %s30, 1
      %s32 = scalar_select %p31, 0, %s30
      %s33 = sadd.s32 1, %s22
      %s34 = scalar_select %p31, %s33, %s22
      %p35 = scmp.ge.s32.totalorder %s34, 1
      %s36 = scalar_select %p35, 0, %s34
      %s37 = sadd.s32 1, %s21
      %s38 = scalar_select %p35, %s37, %s21
      %p39 = scmp.ge.s32.totalorder %s38, 2
      %s40 = scalar_select %p39, 0, %s38
      %s41 = ssub.s32 %s21, %s40
      %s42 = ssub.s32 %s22, %s36
      %s43 = sor.u32 %s41, %s42
      %p44 = scmp.eq.s32.totalorder %s43, 0
      %s46 = sadd.s32 %s45, 1
      %s47 = scalar_select %p44, %s45, %s46
      %p50 = pneg %p44
      %p51 = scmp.eq.s32.totalorder %s14, 1
      %p52 = por %p50, %p51
      %p53 = scmp.ne.s32.totalorder %s45, %s48
      %p54 = scmp.eq.s32.totalorder %s14, 0
      %p55 = por %p53, %p54
      %p56 = scmp.ne.s32.totalorder %s45, %s48
      %p57 = scmp.eq.s32.totalorder %s19, 1
      %p58 = por %p56, %p57
      %p59 = scmp.ne.s32.totalorder %s48, %s49
      %p60 = scmp.eq.s32.totalorder %s19, 0
      %p61 = por %p59, %p60
      %p62 = scmp.ne.s32.totalorder %s48, %s49
      %p63 = scmp.eq.s32.totalorder %s20, 1
      %p64 = por %p62, %p63
      %p66 = scmp.ne.s32.totalorder %s49, %s65
      %p67 = scmp.eq.s32.totalorder %s20, 0
      %p68 = por %p66, %p67
      %s69 = ssub.s32 1, %s21
      %s70 = ssub.s32 1, %s40
      %s71 = ssub.s32 %s69, %s70
      %s72 = ssub.s32 %s23, %s32
      %s73 = sor.u32 %s71, %s72
      %p74 = scmp.eq.s32.totalorder %s73, 0
      %s76 = sadd.s32 %s75, 1
      %s77 = scalar_select %p74, %s75, %s76
      %p80 = pneg %p74
      %p81 = scmp.eq.s32.totalorder %s14, 1
      %p82 = por %p80, %p81
      %p83 = scmp.ne.s32.totalorder %s75, %s78
      %p84 = scmp.eq.s32.totalorder %s14, 0
      %p85 = por %p83, %p84
      %p86 = scmp.ne.s32.totalorder %s75, %s78
      %p87 = scmp.eq.s32.totalorder %s19, 1
      %p88 = por %p86, %p87
      %p89 = scmp.ne.s32.totalorder %s78, %s79
      %p90 = scmp.eq.s32.totalorder %s19, 0
      %p91 = por %p89, %p90
      %p92 = scmp.ne.s32.totalorder %s78, %s79
      %p93 = scmp.eq.s32.totalorder %s20, 1
      %p94 = por %p92, %p93
      %p96 = scmp.ne.s32.totalorder %s79, %s95
      %p97 = scmp.eq.s32.totalorder %s20, 0
      %p98 = por %p96, %p97
      %s99 = ssub.s32 %s21, %s40
      %s100 = ssub.s32 %s22, %s36
      %s101 = sor.u32 %s99, %s100
      %p102 = scmp.eq.s32.totalorder %s101, 0
      %s104 = sadd.s32 %s103, 1
      %s105 = scalar_select %p102, %s103, %s104
      %p108 = pneg %p102
      %p109 = scmp.eq.s32.totalorder %s14, 1
      %p110 = por %p108, %p109
      %p111 = scmp.ne.s32.totalorder %s103, %s106
      %p112 = scmp.eq.s32.totalorder %s14, 0
      %p113 = por %p111, %p112
      %p114 = scmp.ne.s32.totalorder %s103, %s106
      %p115 = scmp.eq.s32.totalorder %s19, 1
      %p116 = por %p114, %p115
      %p117 = scmp.ne.s32.totalorder %s106, %s107
      %p118 = scmp.eq.s32.totalorder %s19, 0
      %p119 = por %p117, %p118
      %p120 = scmp.ne.s32.totalorder %s106, %s107
      %p121 = scmp.eq.s32.totalorder %s20, 1
      %p122 = por %p120, %p121
      %p124 = scmp.ne.s32.totalorder %s107, %s123
      %p125 = scmp.eq.s32.totalorder %s20, 0
      %p126 = por %p124, %p125
      %p127 = scmp.le.s32.totalorder 1, %s14
      %p128 = scmp.lt.s32.totalorder %s14, 3
      %p129 = pnand %p127, %p128
      %p130 = pneg %p129
      // Predicated region
      $region9: #{tpu_custom_call.1} parent=5 // pred_check
        _
      $region10: #{tpu_custom_call.1} parent=5 // pred_check_branch
        %132 = sbr.rel (%p129) target = $region12
      $region11: #{tpu_custom_call.1} parent=5 // pred_region
        %s133 = ssub.s32 %s14, 1
      $region12: #{tpu_custom_call.1} parent=5 // pred_fallthru
        _
      %p134 = scmp.lt.s32.totalorder %s14, 2
      // Predicated region
      $region13: #{tpu_custom_call.1} parent=5 // pred_check
        %p135 = pneg %p134
      $region14: #{tpu_custom_call.1} parent=5 // pred_check_branch
        %137 = sbr.rel (%p135) target = $region16
      $region15: #{tpu_custom_call.1} parent=5 // pred_region
        // Predicated region
        $region17: #{tpu_custom_call.1} parent=15 // pred_check
          %p138 = pneg %p55
        $region18: #{tpu_custom_call.1} parent=15 // pred_check_branch
          %140 = sbr.rel (%p138) target = $region20
        $region19: #{tpu_custom_call.1} parent=15 // pred_region
          %s141 = sand.u32 %s45, 1
          %s142 = scalar_lea.sflag [#allocation6], %s141
          %s143 = sand.u32 %s45, 1
          %s144 = smul.addr %s143, 8
          %s145 = scalar_lea.vmem [#allocation5], %s144
          %s147 = ssub.s32 128, 128
          %148 = vsyncadd %s142, %s147
          %s149 = sadd.s32 %s22, %s21
          %s150 = smul.addr %s149, 128
          %s151 = scalar_lea.hbm %s0, %s150
          %s153 = sshll.u32 %s145, 4
          %s154 = int_to_ptr.vmem [resolvable:$true] %s153
          %156 = dma.hbm_to_vmem [thread:$0]  %s151, 128, %s154, %s142
        $region20: #{tpu_custom_call.1} parent=15 // pred_fallthru
          _
        // Predicated region
        $region21: #{tpu_custom_call.1} parent=15 // pred_check
          %p157 = pneg %p85
        $region22: #{tpu_custom_call.1} parent=15 // pred_check_branch
          %159 = sbr.rel (%p157) target = $region24
        $region23: #{tpu_custom_call.1} parent=15 // pred_region
          %s160 = sand.u32 %s75, 1
          %s161 = scalar_lea.sflag [#allocation8], %s160
          %s162 = sand.u32 %s75, 1
          %s163 = smul.addr %s162, 8
          %s164 = scalar_lea.vmem [#allocation7], %s163
          %s165 = ssub.s32 1, %s21
          %s167 = ssub.s32 128, 128
          %168 = vsyncadd %s161, %s167
          %s169 = sadd.s32 %s23, %s165
          %s170 = smul.addr %s169, 128
          %s171 = scalar_lea.hbm %s1, %s170
          %s173 = sshll.u32 %s164, 4
          %s174 = int_to_ptr.vmem [resolvable:$true] %s173
          %176 = dma.hbm_to_vmem [thread:$0]  %s171, 128, %s174, %s161
        $region24: #{tpu_custom_call.1} parent=15 // pred_fallthru
          _
      $region16: #{tpu_custom_call.1} parent=5 // pred_fallthru
        _
      %p177 = scmp.le.s32.totalorder 1, %s14
      %p178 = scmp.lt.s32.totalorder %s14, 3
      %p179 = pnand %p177, %p178
      %p180 = pneg %p179
      // Predicated region
      $region25: #{tpu_custom_call.1} parent=5 // pred_check
        _
      $region26: #{tpu_custom_call.1} parent=5 // pred_check_branch
        %182 = sbr.rel (%p179) target = $region28
      $region27: #{tpu_custom_call.1} parent=5 // pred_region
        %s183 = ssub.s32 %s14, 1
        %s184 = sand.u32 %s48, 1
        %s185 = scalar_lea.sflag [#allocation6], %s184
        %s186 = sand.u32 %s48, 1
        %s187 = smul.addr %s186, 8
        %s188 = scalar_lea.vmem [#allocation5], %s187
        // Predicated region
        $region29: #{tpu_custom_call.1} parent=27 // pred_check
          %p189 = pneg %p61
        $region30: #{tpu_custom_call.1} parent=27 // pred_check_branch
          %191 = sbr.rel (%p189) target = $region32
        $region31: #{tpu_custom_call.1} parent=27 // pred_region
          %192 = dma.done %s185, 128
        $region32: #{tpu_custom_call.1} parent=27 // pred_fallthru
          _
        %s193 = sand.u32 %s78, 1
        %s194 = scalar_lea.sflag [#allocation8], %s193
        %s195 = sand.u32 %s78, 1
        %s196 = smul.addr %s195, 8
        %s197 = scalar_lea.vmem [#allocation7], %s196
        // Predicated region
        $region33: #{tpu_custom_call.1} parent=27 // pred_check
          %p198 = pneg %p91
        $region34: #{tpu_custom_call.1} parent=27 // pred_check_branch
          %200 = sbr.rel (%p198) target = $region36
        $region35: #{tpu_custom_call.1} parent=27 // pred_region
          %201 = dma.done %s194, 128
        $region36: #{tpu_custom_call.1} parent=27 // pred_fallthru
          _
        %s202 = sand.u32 %s48, 1
        %s203 = scalar_lea.sflag [#allocation6], %s202
        %s204 = sand.u32 %s48, 1
        %s205 = smul.addr %s204, 8
        %s206 = scalar_lea.vmem [#allocation5], %s205
        %p207 = pneg %p61
        %p208 = pneg %p58
        %s209 = sand.u32 %s78, 1
        %s210 = scalar_lea.sflag [#allocation8], %s209
        %s211 = sand.u32 %s78, 1
        %s212 = smul.addr %s211, 8
        %s213 = scalar_lea.vmem [#allocation7], %s212
        %p214 = pneg %p91
        %p215 = pneg %p88
        %p216 = pneg %p119
        %p217 = pneg %p116
        %p218 = scmp.lt.s32.totalorder %s24, 1
        %s219 = scalar_select %p218, %s24, 1
        %p220 = scmp.lt.s32.totalorder %s25, 0
        %s221 = scalar_select %p220, %s25, 0
        %s222 = sadd.s32 %s221, %s219
        %s223 = scalar_lea.vmem %s2, %s222
        %s224 = ssub.s32 1, %s24
        %p225 = scmp.lt.s32.totalorder %s24, 1
        %s226 = scalar_select %p225, %s24, 1
        %p227 = scmp.lt.s32.totalorder %s25, 0
        %s228 = scalar_select %p227, %s25, 0
        %s229 = sadd.s32 %s228, %s226
        %s230 = scalar_lea.vmem %s2, %s229
        %p231 = scmp.eq.s32.totalorder %s26, 0
        // Predicated region
        $region37: #{tpu_custom_call.1} parent=27 // pred_check
          %p232 = pneg %p231
        $region38: #{tpu_custom_call.1} parent=27 // pred_check_branch
          %234 = sbr.rel (%p232) target = $region40
        $region39: #{tpu_custom_call.1} parent=27 // pred_region
          %vm235 = vcmask 7168
          %236 = vst.msk [vmem:[#allocation2] sm:$0xff] %vm235, -inf
          %237 = vst.msk [vmem:[#allocation3] sm:$0xff] %vm235, 0.0
          %238 = vst.msk [vmem:[#allocation4] sm:$0xff] %vm235, 0.0
        $region40: #{tpu_custom_call.1} parent=27 // pred_fallthru
          _
        %v239 = vld [vmem:[%s188] sm:$0xff]
        %v240 = vld [vmem:[%s197] sm:$0xff]
        %v241 = vmul.f32 %v239, %v239
        %242 = vadd.xlane.f32.xlu0 %v241
        %v243 = vpop.xlane.xlu0 %242
        %v244 = vmax.f32 %v243, 1e-24
        %v245 = vrsqrt.pop %v244
        %v246 = vmul.f32 %v240, %v240
        %247 = vadd.xlane.f32.xlu0 %v246
        %v248 = vpop.xlane.xlu0 %247
        %v249 = vmax.f32 %v248, 1e-24
        %v250 = vrsqrt.pop %v249
        %v251 = vmul.f32 %v245, 2.0
        %v252 = vmul.f32 %v239, %v251
        %v253 = vmul.f32 %v240, %v250
        %p254 = scmp.eq.s32.totalorder %s26, %s25
        // Predicated region
        $region41: #{tpu_custom_call.1} parent=27 // pred_check
          %p255 = pneg %p254
        $region42: #{tpu_custom_call.1} parent=27 // pred_check_branch
          %257 = sbr.rel (%p255) target = $region44
        $region43: #{tpu_custom_call.1} parent=27 // pred_region
          %v258 = vmul.f32 %v252, %v253
          %259 = vadd.xlane.f32.xlu0 %v258
          %v260 = vpop.xlane.xlu0 %259
          %vm261 = vcmask 7168
          %262 = vst.msk [vmem:[#allocation4] sm:$0xff] %vm261, %v260
        $region44: #{tpu_custom_call.1} parent=27 // pred_fallthru
          _
        %263 = vmatprep.subr.mxu0 0.0
        %264 = vmatpush1.xpose.msra.mxu0 %v253
        %265 = vmatprep.subr.mxu0 0.0
        %266 = vmatpush1.xpose.msra.mxu0 0.0
        %267 = vmatprep.subr.mxu0 0.0
        %268 = vmatpush1.xpose.msra.mxu0 0.0
        %269 = vmatprep.subr.mxu0 0.0
        %270 = vmatpush1.xpose.msra.mxu0 0.0
        %271 = vmatprep.subr.mxu0 0.0
        %272 = vmatpush1.xpose.msra.mxu0 0.0
        %273 = vmatprep.subr.mxu0 0.0
        %274 = vmatpush1.xpose.msra.mxu0 0.0
        %275 = vmatprep.subr.mxu0 0.0
        %276 = vmatpush1.xpose.msra.mxu0 0.0
        %277 = vmatprep.subr.mxu0 0.0
        %278 = vmatpush1.xpose.msra.mxu0 0.0
        %279 = vmatprep.subr.mxu0 0.0
        %280 = vmatpush1.xpose.msra.mxu0 0.0
        %281 = vmatprep.subr.mxu0 0.0
        %282 = vmatpush1.xpose.msra.mxu0 0.0
        %283 = vmatprep.subr.mxu0 0.0
        %284 = vmatpush1.xpose.msra.mxu0 0.0
        %285 = vmatprep.subr.mxu0 0.0
        %286 = vmatpush1.xpose.msra.mxu0 0.0
        %287 = vmatprep.subr.mxu0 0.0
        %288 = vmatpush1.xpose.msra.mxu0 0.0
        %289 = vmatprep.subr.mxu0 0.0
        %290 = vmatpush1.xpose.msra.mxu0 0.0
        %291 = vmatprep.subr.mxu0 0.0
        %292 = vmatpush1.xpose.msra.mxu0 0.0
        %293 = vmatprep.subr.mxu0 0.0
        %294 = vmatpush1.xpose.msra.mxu0 0.0
        %295 = vmatprep.subr.mxu0 0.0
        %296 = vmatpush1.xpose.msra.mxu0 0.0
        %297 = vmatprep.subr.mxu0 0.0
        %298 = vmatpush1.xpose.msra.mxu0 0.0
        %299 = vmatprep.subr.mxu0 0.0
        %300 = vmatpush1.xpose.msra.mxu0 0.0
        %301 = vmatprep.subr.mxu0 0.0
        %302 = vmatpush1.xpose.msra.mxu0 0.0
        %303 = vmatprep.subr.mxu0 0.0
        %304 = vmatpush1.xpose.msra.mxu0 0.0
        %305 = vmatprep.subr.mxu0 0.0
        %306 = vmatpush1.xpose.msra.mxu0 0.0
        %307 = vmatprep.subr.mxu0 0.0
        %308 = vmatpush1.xpose.msra.mxu0 0.0
        %309 = vmatprep.subr.mxu0 0.0
        %310 = vmatpush1.xpose.msra.mxu0 0.0
        %311 = vmatprep.subr.mxu0 0.0
        %312 = vmatpush1.xpose.msra.mxu0 0.0
        %313 = vmatprep.subr.mxu0 0.0
        %314 = vmatpush1.xpose.msra.mxu0 0.0
        %315 = vmatprep.subr.mxu0 0.0
        %316 = vmatpush1.xpose.msra.mxu0 0.0
        %317 = vmatprep.subr.mxu0 0.0
        %318 = vmatpush1.xpose.msra.mxu0 0.0
        %319 = vmatprep.subr.mxu0 0.0
        %320 = vmatpush1.xpose.msra.mxu0 0.0
        %321 = vmatprep.subr.mxu0 0.0
        %322 = vmatpush1.xpose.msra.mxu0 0.0
        %323 = vmatprep.subr.mxu0 0.0
        %324 = vmatpush1.xpose.msra.mxu0 0.0
        %325 = vmatprep.subr.mxu0 0.0
        %326 = vmatpush1.xpose.msra.mxu0 0.0
        %327 = vmatprep.mubr.f32.mxu0 0.0
        %328 = vmatmul.mubr.f32.gmra.mrb[0].mxu0 %v252
        %v329 = vpop.f32.mrb[0].mxu0
        %v330 = vadd.f32 0.0, %v329
        %v331 = vpop.f32.mrb[0].mxu0
        %332 = vdwg.mxu0
        %v333 = vld [vmem:[#allocation2] sm:$0xff]
        %vm334 = vcmask 64512
        %v335 = vsel %vm334, %v330, -inf
        %336 = vmax.xlane.f32.xlu0 %v335
        %v337 = vpop.xlane.xlu0 %336
        %v338 = vmax.f32 %v333, %v337
        %v339 = vld [vmem:[#allocation3] sm:$0xff]
        %v340 = vsub.f32 %v333, %v338
        %v341 = vmul.f32 %v340, 1.442695
        %v342 = vpow.pop %v341
        %v343 = vmul.f32 %v339, %v342
        %345 = vset.pattern.permute.xlu0 0
        %346 = vperm.xlu0 %345, %v338
        %v347 = vpop.permute.xlu0 %346
        %v349 = vsub.f32 %v330, %v347
        %v350 = vmul.f32 %v349, 1.442695
        %v351 = vpow.pop %v350
        %v352 = vsel %vm334, %v351, 0.0
        %353 = vadd.xlane.f32.xlu0 %v352
        %v354 = vpop.xlane.xlu0 %353
        %v355 = vadd.f32 %v343, %v354
        %vm356 = vcmask 7168
        %357 = vst.msk [vmem:[#allocation3] sm:$0xff] %vm356, %v355
        %358 = vst.msk [vmem:[#allocation2] sm:$0xff] %vm356, %v338
        // Predicated region
        $region45: #{tpu_custom_call.1} parent=27 // pred_check
          %p359 = pneg %p231
        $region46: #{tpu_custom_call.1} parent=27 // pred_check_branch
          %361 = sbr.rel (%p359) target = $region48
        $region47: #{tpu_custom_call.1} parent=27 // pred_region
          %v362 = vld [vmem:[#allocation2] sm:$0xff]
          %v363 = vld [vmem:[#allocation3] sm:$0xff]
          %v364 = vlog2.pop %v363
          %v365 = vmul.f32 %v364, 0.6931472
          %v366 = vadd.f32 %v362, %v365
          %v367 = vld [vmem:[#allocation4] sm:$0xff]
          %v368 = vsub.f32 %v366, %v367
          %v369 = vsel %vm356, %v368, 0.0
          %v370 = vrot.slane %v369, 4
          %v371 = vadd.f32 %v369, %v370
          %v372 = vrot.slane %v371, 2
          %v373 = vadd.f32 %v371, %v372
          %v374 = vrot.slane %v373, 1
          %v375 = vadd.f32 %v373, %v374
          %vm376 = vcmask 0
          %377 = vst.msk [vmem:[%s230] sm:$0x1] %vm376, %v375
        $region48: #{tpu_custom_call.1} parent=27 // pred_fallthru
          _
        %p378 = scmp.lt.s32.totalorder %s24, 1
        %s379 = scalar_select %p378, %s24, 1
        %p380 = scmp.lt.s32.totalorder %s25, 0
        %s381 = scalar_select %p380, %s25, 0
        %s382 = sadd.s32 %s381, %s379
        %s383 = scalar_lea.vmem %s2, %s382
        // Predicated region
        $region49: #{tpu_custom_call.1} parent=27 // pred_check
          %p384 = pneg %p116
        $region50: #{tpu_custom_call.1} parent=27 // pred_check_branch
          %386 = sbr.rel (%p384) target = $region52
        $region51: #{tpu_custom_call.1} parent=27 // pred_region
          _
        $region52: #{tpu_custom_call.1} parent=27 // pred_fallthru
          _
      $region28: #{tpu_custom_call.1} parent=5 // pred_fallthru
        _
      %p387 = scmp.le.s32.totalorder 2, %s14
      // Predicated region
      $region53: #{tpu_custom_call.1} parent=5 // pred_check
        %p388 = pneg %p387
      $region54: #{tpu_custom_call.1} parent=5 // pred_check_branch
        %390 = sbr.rel (%p388) target = $region56
      $region55: #{tpu_custom_call.1} parent=5 // pred_region
        %s391 = ssub.s32 %s14, 2
        // Predicated region
        $region57: #{tpu_custom_call.1} parent=55 // pred_check
          %p392 = pneg %p122
        $region58: #{tpu_custom_call.1} parent=55 // pred_check_branch
          %394 = sbr.rel (%p392) target = $region60
        $region59: #{tpu_custom_call.1} parent=55 // pred_region
          %p395 = scmp.lt.s32.totalorder %s27, 1
          %s396 = scalar_select %p395, %s27, 1
          %p397 = scmp.lt.s32.totalorder %s28, 0
          %s398 = scalar_select %p397, %s28, 0
          %s399 = sadd.s32 %s398, %s396
          %s400 = scalar_lea.vmem %s2, %s399
        $region60: #{tpu_custom_call.1} parent=55 // pred_fallthru
          _
      $region56: #{tpu_custom_call.1} parent=5 // pred_fallthru
        _
    $region6: #{tpu_custom_call.1} parent=1 // loop_footer
      %s18 = sadd.s32 1, %s14
    $region7: #{tpu_custom_call.1} parent=1 // loop_footer_branch
      %13 = sbr.rel target = $region3
    $region8: #{tpu_custom_call.1} parent=1 // loop_exit
      _
    %401 = vsyncpa [#allocation6], 1
    %s402 = scalar_lea.sflag [#allocation6], 1
    %403 = vsyncpa %s402, 1
    %404 = vsyncpa [#allocation8], 1
    %s405 = scalar_lea.sflag [#allocation8], 1
    %406 = vsyncpa %s405, 1

</llo_original>
